<compile_context>
chip_gen: v5e
topology: v5e:2x2
jax: 0.10.0
libtpu: 0.0.40
codegen_flags: <defaults>
</compile_context>

<pallas_src>
import jax
import jax.numpy as jnp
from jax.experimental import pallas as pl
from jax.experimental.pallas import tpu as pltpu

HIGH = jax.lax.Precision.HIGHEST  # used only by the pure-JAX reference


# --------------------------------------------------------------------------
# Wrapper: parameter folding/fusion + pallas_call.  One image per grid step,
# all four branches fused inside the kernel.
# --------------------------------------------------------------------------
def inception_forward(x_nchw, params):
    x = x_nchw.astype(jnp.float32)
    N, Cin, H, W = x.shape
    M = H * W

    (w1, s1, b1,
     w2a, s2a, b2a, w2b, s2b, b2b,
     w3a, s3a, b3a, w3b, s3b, b3b,
     w4, s4, b4) = params

    C1 = w1.shape[1]
    C2r, C2 = w2b.shape[2], w2b.shape[3]
    C3r, C3 = w3b.shape[2], w3b.shape[3]
    C4 = w4.shape[1]
    C23r = C2r + C3r
    C23r_pad = -(-C23r // 8) * 8          # pad each im2col tap chunk to 8-row multiple
    C23 = C2 + C3
    Cout = C1 + C23 + C4
    K_im2col = 9 * C23r_pad + Cin         # fat-matmul contraction depth (152 here)

    # --- fold BN scale into weights; transpose so channels sit on sublanes ---
    def foldT(w, s):                      # (Cin, Co) * (1, Co) -> (Co, Cin)
        return (w * s).T

    # fused input 1x1 weights: [branch1 | branch2-reduce | branch3-reduce | pad]
    win = jnp.concatenate(
        [foldT(w1, s1), foldT(w2a, s2a), foldT(w3a, s3a),
         jnp.zeros((C23r_pad - C23r, Cin), jnp.float32)], axis=0)   # (C1+C23r_pad, Cin)
    bin_ = jnp.concatenate(
        [b1, b2a, b3a, jnp.zeros((1, C23r_pad - C23r), jnp.float32)],
        axis=1).reshape(-1, 1)                                      # (C1+C23r_pad, 1)

    # fused im2col weight: rows = [branch2 3x3 | branch3 3x3 | branch4 1x1]
    # cols = 9 tap chunks of C23r_pad (=16) rows each, then Cin pooled rows.
    w2b_f = (w2b * s2b.reshape(1, 1, 1, C2)).reshape(9, C2r, C2)
    w3b_f = (w3b * s3b.reshape(1, 1, 1, C3)).reshape(9, C3r, C3)
    wbig = jnp.zeros((C23 + C4, K_im2col), jnp.float32)
    for k in range(9):
        base = k * C23r_pad
        wbig = wbig.at[:C2, base:base + C2r].set(w2b_f[k].T)
        wbig = wbig.at[C2:C23, base + C2r:base + C2r + C3r].set(w3b_f[k].T)
    wbig = wbig.at[C23:, 9 * C23r_pad:].set(foldT(w4, s4))
    bbig = jnp.concatenate([b2b, b3b, b4], axis=1).reshape(-1, 1)   # (C23+C4, 1)

    # bf16 MXU operands (accumulation stays f32 inside the kernel)
    win = win.astype(jnp.bfloat16)
    wbig = wbig.astype(jnp.bfloat16)

    # --- per-tap validity masks on the flattened H*W (lane) axis ------------
    yy = (jnp.arange(M, dtype=jnp.int32) // W).reshape(1, M)
    xx = (jnp.arange(M, dtype=jnp.int32) % W).reshape(1, M)
    mmul_list, mpool_list = [], []
    for k in range(9):
        oy, ox = k // 3 - 1, k % 3 - 1
        valid = ((yy + oy >= 0) & (yy + oy < H) &
                 (xx + ox >= 0) & (xx + ox < W))
        mmul_list.append(valid.astype(jnp.float32))                       # 0 / 1
        mpool_list.append(jnp.where(valid, jnp.float32(0.0),
                                    jnp.float32(-1e30)))                  # 0 / -big
    mmul = jnp.stack(mmul_list, axis=0)                                   # (9, 1, M)
    mpool = jnp.stack(mpool_list, axis=0)                                 # (9, 1, M)

    xr = x.reshape(N, Cin, M)                                             # NCHW -> (N,C,HW)

    # ----------------------------------------------------------------------
    # Kernel: one image, (C, H*W) layout.  All four branches fused.
    # ----------------------------------------------------------------------
    def kernel(x_ref, mmul_ref, mpool_ref, win_ref, bin_ref,
               wbig_ref, bbig_ref, out_ref):
        m = x_ref.shape[1]

        xf = x_ref[...]                                # (Cin, M) f32 (pool path)
        xb = xf.astype(jnp.bfloat16)                   # bf16 MXU operand

        # fused 1x1 convs: branch1 + branch2-reduce + branch3-reduce (+zero pad)
        hin = jnp.dot(win_ref[...], xb, preferred_element_type=jnp.float32)
        hin = jnp.maximum(hin + bin_ref[...], 0.0)     # (C1 + C23r_pad, M) f32
        y1 = hin[:C1, :]                               # (C1, M)
        h23 = hin[C1:, :]                              # (C23r_pad, M), pad rows = 0

        # tap loop: build im2col stack (rolled + masked h23 copies) and the
        # 3x3 max-pool (additive 0/-big mask, no compare+select).
        pooled = xf                                    # center tap, always valid
        taps = []
        for k in range(9):
            oy, ox = k // 3 - 1, k % 3 - 1
            s = oy * W + ox
            if s == 0:
                taps.append(h23)
            else:
                sh = (-s) % m                          # out[:, i] = v[:, i + s]
                h_s = pltpu.roll(h23, shift=sh, axis=1)
                x_s = pltpu.roll(xf, shift=sh, axis=1)
                taps.append(h_s * mmul_ref[k])         # zero wrapped/out-of-range lanes
                pooled = jnp.maximum(pooled, x_s + mpool_ref[k])
        taps.append(pooled)                            # (Cin, M)
        stack = jnp.concatenate(taps, axis=0).astype(jnp.bfloat16)   # (K_im2col, M)

        # ONE fat matmul: [branch2 3x3 | branch3 3x3 | branch4 1x1] fused
        big = jnp.dot(wbig_ref[...], stack, preferred_element_type=jnp.float32)
        big = jnp.maximum(big + bbig_ref[...], 0.0)    # (C2+C3+C4, M)

        # two sublane-aligned, lane-dense stores (offsets 0 and C1)
        out_ref[:C1, :] = y1
        out_ref[C1:, :] = big

    def full_spec(a):
        nd = a.ndim
        return pl.BlockSpec(a.shape, lambda n, _nd=nd: (0,) * _nd)

    consts = [mmul, mpool, win, bin_, wbig, bbig]
    in_specs = [pl.BlockSpec((None, Cin, M), lambda n: (n, 0, 0))]
    in_specs += [full_spec(a) for a in consts]

    out = pl.pallas_call(
        kernel,
        out_shape=jax.ShapeDtypeStruct((N, Cout, M), jnp.float32),
        grid=(N,),
        in_specs=in_specs,
        out_specs=pl.BlockSpec((None, Cout, M), lambda n: (n, 0, 0)),
        compiler_params=pltpu.CompilerParams(
            dimension_semantics=("parallel",)),
    )(xr, *consts)

    return out.reshape(N, Cout, H, W)                  # already NCHW


# --------------------------------------------------------------------------
# Deterministic parameter init (BN folded into scale/bias, eval mode, eps=1e-3)
# --------------------------------------------------------------------------
def _make_bn(key, c, eps=1e-3):
    k1, k2, k3, k4 = jax.random.split(key, 4)
    gamma = jax.random.uniform(k1, (c,), jnp.float32, 0.5, 1.5)
    beta = 0.1 * jax.random.normal(k2, (c,), jnp.float32)
    mean = 0.1 * jax.random.normal(k3, (c,), jnp.float32)
    var = jax.random.uniform(k4, (c,), jnp.float32, 0.5, 1.5)
    scale = gamma / jnp.sqrt(var + eps)
    bias = beta - mean * scale
    return scale.reshape(1, c), bias.reshape(1, c)


def init_params(key, cin, c1, c2r, c2, c3r, c3, c4):
    ks = jax.random.split(key, 12)
    w = lambda k, shape: 0.1 * jax.random.normal(k, shape, jnp.float32)
    w1 = w(ks[0], (cin, c1));        s1, b1 = _make_bn(ks[1], c1)
    w2a = w(ks[2], (cin, c2r));      s2a, b2a = _make_bn(ks[3], c2r)
    w2b = w(ks[4], (3, 3, c2r, c2)); s2b, b2b = _make_bn(ks[5], c2)
    w3a = w(ks[6], (cin, c3r));      s3a, b3a = _make_bn(ks[7], c3r)
    w3b = w(ks[8], (3, 3, c3r, c3)); s3b, b3b = _make_bn(ks[9], c3)
    w4 = w(ks[10], (cin, c4));       s4, b4 = _make_bn(ks[11], c4)
    return (w1, s1, b1,
            w2a, s2a, b2a, w2b, s2b, b2b,
            w3a, s3a, b3a, w3b, s3b, b3b,
            w4, s4, b4)


# --------------------------------------------------------------------------
# Pure-JAX reference (for correctness check only)
# --------------------------------------------------------------------------
def inception_reference(x_nchw, params):
    x = jnp.transpose(x_nchw, (0, 2, 3, 1)).astype(jnp.float32)
    (w1, s1, b1,
     w2a, s2a, b2a, w2b, s2b, b2b,
     w3a, s3a, b3a, w3b, s3b, b3b,
     w4, s4, b4) = params

    def conv(v, wt, pad):
        if wt.ndim == 2:
            wt = wt[None, None]
        return jax.lax.conv_general_dilated(
            v, wt, (1, 1), pad,
            dimension_numbers=("NHWC", "HWIO", "NHWC"), precision=HIGH)

    def bnr(v, s, b):
        return jnp.maximum(v * s.reshape(1, 1, 1, -1) + b.reshape(1, 1, 1, -1), 0.0)

    y1 = bnr(conv(x, w1, "VALID"), s1, b1)
    h2 = bnr(conv(x, w2a, "VALID"), s2a, b2a)
    y2 = bnr(conv(h2, w2b, ((1, 1), (1, 1))), s2b, b2b)
    h3 = bnr(conv(x, w3a, "VALID"), s3a, b3a)
    y3 = bnr(conv(h3, w3b, ((1, 1), (1, 1))), s3b, b3b)
    pooled = jax.lax.reduce_window(
        x, -jnp.inf, jax.lax.max, (1, 3, 3, 1), (1, 1, 1, 1),
        ((0, 0), (1, 1), (1, 1), (0, 0)))
    y4 = bnr(conv(pooled, w4, "VALID"), s4, b4)
    y = jnp.concatenate([y1, y2, y3, y4], axis=-1)
    return jnp.transpose(y, (0, 3, 1, 2))


if __name__ == "__main__":
    key = jax.random.PRNGKey(0)
    kx, kp = jax.random.split(key)

    # Inception(in_channels=8, ch1_1=8, ch3_3red=8, ch3_3=16,
    #           ch5_5red=4, ch5_5=8, pool_proj=8) on a (2, 8, 16, 16) NCHW input.
    N, Cin, H, W = 2, 8, 16, 16
    ch1_1, ch3_3red, ch3_3 = 8, 8, 16
    ch5_5red, ch5_5, pool_proj = 4, 8, 8

    x = jax.random.normal(kx, (N, Cin, H, W), jnp.float32)
    params = init_params(kp, Cin, ch1_1, ch3_3red, ch3_3, ch5_5red, ch5_5, pool_proj)

    out = inception_forward(x, params)
    out = jax.block_until_ready(out)

    ref = inception_reference(x, params)
    assert out.shape == (N, ch1_1 + ch3_3 + ch5_5 + pool_proj, H, W), out.shape
    # bf16 MXU operands (f32 accumulate) vs HIGHEST-precision f32 reference
    assert jnp.allclose(out, ref, rtol=2e-2, atol=3e-2), \
        float(jnp.max(jnp.abs(out - ref)))

    print("KERNEL_OK")
</pallas_src>

<mosaic_0001>
module attributes {stable_mosaic.version = 11 : i64} {
  func.func @kernel(%arg0: i32, %arg1: memref<1x8x256xf32, #tpu.memory_space<vmem>>, %arg2: memref<9x1x256xf32, #tpu.memory_space<vmem>>, %arg3: memref<9x1x256xf32, #tpu.memory_space<vmem>>, %arg4: memref<24x8xbf16, #tpu.memory_space<vmem>>, %arg5: memref<24x1xf32, #tpu.memory_space<vmem>>, %arg6: memref<32x152xbf16, #tpu.memory_space<vmem>>, %arg7: memref<32x1xf32, #tpu.memory_space<vmem>>, %arg8: memref<1x40x256xf32, #tpu.memory_space<vmem>>) attributes {dimension_semantics = [#tpu.dimension_semantics<parallel>], iteration_bounds = array<i64: 2>, scalar_prefetch = 0 : i64, scratch_operands = 0 : i64, tpu.core_type = #tpu.core_type<tc>, window_params = [{transform_indices = @transform_0, window_bounds = array<i64: 1, 8, 256>}, {pipeline_mode = #tpu.pipeline_mode<synchronous>, transform_indices = @transform_1, window_bounds = array<i64: 9, 1, 256>}, {pipeline_mode = #tpu.pipeline_mode<synchronous>, transform_indices = @transform_2, window_bounds = array<i64: 9, 1, 256>}, {pipeline_mode = #tpu.pipeline_mode<synchronous>, transform_indices = @transform_3, window_bounds = array<i64: 24, 8>}, {pipeline_mode = #tpu.pipeline_mode<synchronous>, transform_indices = @transform_4, window_bounds = array<i64: 24, 1>}, {pipeline_mode = #tpu.pipeline_mode<synchronous>, transform_indices = @transform_5, window_bounds = array<i64: 32, 152>}, {pipeline_mode = #tpu.pipeline_mode<synchronous>, transform_indices = @transform_6, window_bounds = array<i64: 32, 1>}, {transform_indices = @transform_7, window_bounds = array<i64: 1, 40, 256>}]} {
    %c0 = arith.constant 0 : index
    %c0_0 = arith.constant 0 : index
    %c0_1 = arith.constant 0 : index
    %0 = vector.load %arg1[%c0, %c0_0, %c0_1] : memref<1x8x256xf32, #tpu.memory_space<vmem>>, vector<1x8x256xf32>
    %1 = vector.shape_cast %0 : vector<1x8x256xf32> to vector<8x256xf32>
    %2 = arith.truncf %1 : vector<8x256xf32> to vector<8x256xbf16>
    %c0_2 = arith.constant 0 : index
    %c0_3 = arith.constant 0 : index
    %3 = vector.load %arg4[%c0_2, %c0_3] : memref<24x8xbf16, #tpu.memory_space<vmem>>, vector<24x8xbf16>
    %cst = arith.constant dense<0.000000e+00> : vector<24x256xf32>
    %4 = tpu.matmul %3, %2, %cst {dimension_numbers = #tpu.dot_dimension_numbers<[1], [0], [0], [1], [0, 0, 1, 1], [], []>} : vector<24x8xbf16>, vector<8x256xbf16>, vector<24x256xf32> -> vector<24x256xf32>
    %c0_4 = arith.constant 0 : index
    %c0_5 = arith.constant 0 : index
    %5 = vector.load %arg5[%c0_4, %c0_5] : memref<24x1xf32, #tpu.memory_space<vmem>>, vector<24x1xf32>
    %6 = vector.broadcast %5 : vector<24x1xf32> to vector<24x256xf32>
    %7 = arith.addf %4, %6 : vector<24x256xf32>
    %cst_6 = arith.constant 0.000000e+00 : f32
    %8 = vector.broadcast %cst_6 : f32 to vector<24x256xf32>
    %9 = arith.maximumf %7, %8 : vector<24x256xf32>
    %10 = vector.extract_strided_slice %9 {offsets = [0, 0], sizes = [8, 256], strides = [1, 1]} : vector<24x256xf32> to vector<8x256xf32>
    %11 = vector.extract_strided_slice %9 {offsets = [8, 0], sizes = [16, 256], strides = [1, 1]} : vector<24x256xf32> to vector<16x256xf32>
    %c17_i32 = arith.constant 17 : i32
    %12 = tpu.dynamic_rotate %11 by %c17_i32 dim 1 : vector<16x256xf32>, i32 -> vector<16x256xf32>
    %c17_i32_7 = arith.constant 17 : i32
    %13 = tpu.dynamic_rotate %1 by %c17_i32_7 dim 1 : vector<8x256xf32>, i32 -> vector<8x256xf32>
    %c0_8 = arith.constant 0 : index
    %c0_9 = arith.constant 0 : index
    %c0_10 = arith.constant 0 : index
    %14 = vector.load %arg2[%c0_8, %c0_9, %c0_10] : memref<9x1x256xf32, #tpu.memory_space<vmem>>, vector<1x1x256xf32>
    %15 = vector.shape_cast %14 : vector<1x1x256xf32> to vector<1x256xf32>
    %16 = vector.broadcast %15 : vector<1x256xf32> to vector<16x256xf32>
    %17 = arith.mulf %12, %16 : vector<16x256xf32>
    %c0_11 = arith.constant 0 : index
    %c0_12 = arith.constant 0 : index
    %c0_13 = arith.constant 0 : index
    %18 = vector.load %arg3[%c0_11, %c0_12, %c0_13] : memref<9x1x256xf32, #tpu.memory_space<vmem>>, vector<1x1x256xf32>
    %19 = vector.shape_cast %18 : vector<1x1x256xf32> to vector<1x256xf32>
    %20 = vector.broadcast %19 : vector<1x256xf32> to vector<8x256xf32>
    %21 = arith.addf %13, %20 : vector<8x256xf32>
    %22 = arith.maximumf %1, %21 : vector<8x256xf32>
    %c16_i32 = arith.constant 16 : i32
    %23 = tpu.dynamic_rotate %11 by %c16_i32 dim 1 : vector<16x256xf32>, i32 -> vector<16x256xf32>
    %c16_i32_14 = arith.constant 16 : i32
    %24 = tpu.dynamic_rotate %1 by %c16_i32_14 dim 1 : vector<8x256xf32>, i32 -> vector<8x256xf32>
    %c1 = arith.constant 1 : index
    %c0_15 = arith.constant 0 : index
    %c0_16 = arith.constant 0 : index
    %25 = vector.load %arg2[%c1, %c0_15, %c0_16] : memref<9x1x256xf32, #tpu.memory_space<vmem>>, vector<1x1x256xf32>
    %26 = vector.shape_cast %25 : vector<1x1x256xf32> to vector<1x256xf32>
    %27 = vector.broadcast %26 : vector<1x256xf32> to vector<16x256xf32>
    %28 = arith.mulf %23, %27 : vector<16x256xf32>
    %c1_17 = arith.constant 1 : index
    %c0_18 = arith.constant 0 : index
    %c0_19 = arith.constant 0 : index
    %29 = vector.load %arg3[%c1_17, %c0_18, %c0_19] : memref<9x1x256xf32, #tpu.memory_space<vmem>>, vector<1x1x256xf32>
    %30 = vector.shape_cast %29 : vector<1x1x256xf32> to vector<1x256xf32>
    %31 = vector.broadcast %30 : vector<1x256xf32> to vector<8x256xf32>
    %32 = arith.addf %24, %31 : vector<8x256xf32>
    %33 = arith.maximumf %22, %32 : vector<8x256xf32>
    %c15_i32 = arith.constant 15 : i32
    %34 = tpu.dynamic_rotate %11 by %c15_i32 dim 1 : vector<16x256xf32>, i32 -> vector<16x256xf32>
    %c15_i32_20 = arith.constant 15 : i32
    %35 = tpu.dynamic_rotate %1 by %c15_i32_20 dim 1 : vector<8x256xf32>, i32 -> vector<8x256xf32>
    %c2 = arith.constant 2 : index
    %c0_21 = arith.constant 0 : index
    %c0_22 = arith.constant 0 : index
    %36 = vector.load %arg2[%c2, %c0_21, %c0_22] : memref<9x1x256xf32, #tpu.memory_space<vmem>>, vector<1x1x256xf32>
    %37 = vector.shape_cast %36 : vector<1x1x256xf32> to vector<1x256xf32>
    %38 = vector.broadcast %37 : vector<1x256xf32> to vector<16x256xf32>
    %39 = arith.mulf %34, %38 : vector<16x256xf32>
    %c2_23 = arith.constant 2 : index
    %c0_24 = arith.constant 0 : index
    %c0_25 = arith.constant 0 : index
    %40 = vector.load %arg3[%c2_23, %c0_24, %c0_25] : memref<9x1x256xf32, #tpu.memory_space<vmem>>, vector<1x1x256xf32>
    %41 = vector.shape_cast %40 : vector<1x1x256xf32> to vector<1x256xf32>
    %42 = vector.broadcast %41 : vector<1x256xf32> to vector<8x256xf32>
    %43 = arith.addf %35, %42 : vector<8x256xf32>
    %44 = arith.maximumf %33, %43 : vector<8x256xf32>
    %c1_i32 = arith.constant 1 : i32
    %45 = tpu.dynamic_rotate %11 by %c1_i32 dim 1 : vector<16x256xf32>, i32 -> vector<16x256xf32>
    %c1_i32_26 = arith.constant 1 : i32
    %46 = tpu.dynamic_rotate %1 by %c1_i32_26 dim 1 : vector<8x256xf32>, i32 -> vector<8x256xf32>
    %c3 = arith.constant 3 : index
    %c0_27 = arith.constant 0 : index
    %c0_28 = arith.constant 0 : index
    %47 = vector.load %arg2[%c3, %c0_27, %c0_28] : memref<9x1x256xf32, #tpu.memory_space<vmem>>, vector<1x1x256xf32>
    %48 = vector.shape_cast %47 : vector<1x1x256xf32> to vector<1x256xf32>
    %49 = vector.broadcast %48 : vector<1x256xf32> to vector<16x256xf32>
    %50 = arith.mulf %45, %49 : vector<16x256xf32>
    %c3_29 = arith.constant 3 : index
    %c0_30 = arith.constant 0 : index
    %c0_31 = arith.constant 0 : index
    %51 = vector.load %arg3[%c3_29, %c0_30, %c0_31] : memref<9x1x256xf32, #tpu.memory_space<vmem>>, vector<1x1x256xf32>
    %52 = vector.shape_cast %51 : vector<1x1x256xf32> to vector<1x256xf32>
    %53 = vector.broadcast %52 : vector<1x256xf32> to vector<8x256xf32>
    %54 = arith.addf %46, %53 : vector<8x256xf32>
    %55 = arith.maximumf %44, %54 : vector<8x256xf32>
    %c255_i32 = arith.constant 255 : i32
    %56 = tpu.dynamic_rotate %11 by %c255_i32 dim 1 : vector<16x256xf32>, i32 -> vector<16x256xf32>
    %c255_i32_32 = arith.constant 255 : i32
    %57 = tpu.dynamic_rotate %1 by %c255_i32_32 dim 1 : vector<8x256xf32>, i32 -> vector<8x256xf32>
    %c5 = arith.constant 5 : index
    %c0_33 = arith.constant 0 : index
    %c0_34 = arith.constant 0 : index
    %58 = vector.load %arg2[%c5, %c0_33, %c0_34] : memref<9x1x256xf32, #tpu.memory_space<vmem>>, vector<1x1x256xf32>
    %59 = vector.shape_cast %58 : vector<1x1x256xf32> to vector<1x256xf32>
    %60 = vector.broadcast %59 : vector<1x256xf32> to vector<16x256xf32>
    %61 = arith.mulf %56, %60 : vector<16x256xf32>
    %c5_35 = arith.constant 5 : index
    %c0_36 = arith.constant 0 : index
    %c0_37 = arith.constant 0 : index
    %62 = vector.load %arg3[%c5_35, %c0_36, %c0_37] : memref<9x1x256xf32, #tpu.memory_space<vmem>>, vector<1x1x256xf32>
    %63 = vector.shape_cast %62 : vector<1x1x256xf32> to vector<1x256xf32>
    %64 = vector.broadcast %63 : vector<1x256xf32> to vector<8x256xf32>
    %65 = arith.addf %57, %64 : vector<8x256xf32>
    %66 = arith.maximumf %55, %65 : vector<8x256xf32>
    %c241_i32 = arith.constant 241 : i32
    %67 = tpu.dynamic_rotate %11 by %c241_i32 dim 1 : vector<16x256xf32>, i32 -> vector<16x256xf32>
    %c241_i32_38 = arith.constant 241 : i32
    %68 = tpu.dynamic_rotate %1 by %c241_i32_38 dim 1 : vector<8x256xf32>, i32 -> vector<8x256xf32>
    %c6 = arith.constant 6 : index
    %c0_39 = arith.constant 0 : index
    %c0_40 = arith.constant 0 : index
    %69 = vector.load %arg2[%c6, %c0_39, %c0_40] : memref<9x1x256xf32, #tpu.memory_space<vmem>>, vector<1x1x256xf32>
    %70 = vector.shape_cast %69 : vector<1x1x256xf32> to vector<1x256xf32>
    %71 = vector.broadcast %70 : vector<1x256xf32> to vector<16x256xf32>
    %72 = arith.mulf %67, %71 : vector<16x256xf32>
    %c6_41 = arith.constant 6 : index
    %c0_42 = arith.constant 0 : index
    %c0_43 = arith.constant 0 : index
    %73 = vector.load %arg3[%c6_41, %c0_42, %c0_43] : memref<9x1x256xf32, #tpu.memory_space<vmem>>, vector<1x1x256xf32>
    %74 = vector.shape_cast %73 : vector<1x1x256xf32> to vector<1x256xf32>
    %75 = vector.broadcast %74 : vector<1x256xf32> to vector<8x256xf32>
    %76 = arith.addf %68, %75 : vector<8x256xf32>
    %77 = arith.maximumf %66, %76 : vector<8x256xf32>
    %c240_i32 = arith.constant 240 : i32
    %78 = tpu.dynamic_rotate %11 by %c240_i32 dim 1 : vector<16x256xf32>, i32 -> vector<16x256xf32>
    %c240_i32_44 = arith.constant 240 : i32
    %79 = tpu.dynamic_rotate %1 by %c240_i32_44 dim 1 : vector<8x256xf32>, i32 -> vector<8x256xf32>
    %c7 = arith.constant 7 : index
    %c0_45 = arith.constant 0 : index
    %c0_46 = arith.constant 0 : index
    %80 = vector.load %arg2[%c7, %c0_45, %c0_46] : memref<9x1x256xf32, #tpu.memory_space<vmem>>, vector<1x1x256xf32>
    %81 = vector.shape_cast %80 : vector<1x1x256xf32> to vector<1x256xf32>
    %82 = vector.broadcast %81 : vector<1x256xf32> to vector<16x256xf32>
    %83 = arith.mulf %78, %82 : vector<16x256xf32>
    %c7_47 = arith.constant 7 : index
    %c0_48 = arith.constant 0 : index
    %c0_49 = arith.constant 0 : index
    %84 = vector.load %arg3[%c7_47, %c0_48, %c0_49] : memref<9x1x256xf32, #tpu.memory_space<vmem>>, vector<1x1x256xf32>
    %85 = vector.shape_cast %84 : vector<1x1x256xf32> to vector<1x256xf32>
    %86 = vector.broadcast %85 : vector<1x256xf32> to vector<8x256xf32>
    %87 = arith.addf %79, %86 : vector<8x256xf32>
    %88 = arith.maximumf %77, %87 : vector<8x256xf32>
    %c239_i32 = arith.constant 239 : i32
    %89 = tpu.dynamic_rotate %11 by %c239_i32 dim 1 : vector<16x256xf32>, i32 -> vector<16x256xf32>
    %c239_i32_50 = arith.constant 239 : i32
    %90 = tpu.dynamic_rotate %1 by %c239_i32_50 dim 1 : vector<8x256xf32>, i32 -> vector<8x256xf32>
    %c8 = arith.constant 8 : index
    %c0_51 = arith.constant 0 : index
    %c0_52 = arith.constant 0 : index
    %91 = vector.load %arg2[%c8, %c0_51, %c0_52] : memref<9x1x256xf32, #tpu.memory_space<vmem>>, vector<1x1x256xf32>
    %92 = vector.shape_cast %91 : vector<1x1x256xf32> to vector<1x256xf32>
    %93 = vector.broadcast %92 : vector<1x256xf32> to vector<16x256xf32>
    %94 = arith.mulf %89, %93 : vector<16x256xf32>
    %c8_53 = arith.constant 8 : index
    %c0_54 = arith.constant 0 : index
    %c0_55 = arith.constant 0 : index
    %95 = vector.load %arg3[%c8_53, %c0_54, %c0_55] : memref<9x1x256xf32, #tpu.memory_space<vmem>>, vector<1x1x256xf32>
    %96 = vector.shape_cast %95 : vector<1x1x256xf32> to vector<1x256xf32>
    %97 = vector.broadcast %96 : vector<1x256xf32> to vector<8x256xf32>
    %98 = arith.addf %90, %97 : vector<8x256xf32>
    %99 = arith.maximumf %88, %98 : vector<8x256xf32>
    %100 = tpu.concatenate %17, %28, %39, %50, %11, %61, %72, %83, %94, %99 in 0 : vector<16x256xf32>, vector<16x256xf32>, vector<16x256xf32>, vector<16x256xf32>, vector<16x256xf32>, vector<16x256xf32>, vector<16x256xf32>, vector<16x256xf32>, vector<16x256xf32>, vector<8x256xf32> -> vector<152x256xf32>
    %101 = arith.truncf %100 : vector<152x256xf32> to vector<152x256xbf16>
    %c0_56 = arith.constant 0 : index
    %c0_57 = arith.constant 0 : index
    %102 = vector.load %arg6[%c0_56, %c0_57] : memref<32x152xbf16, #tpu.memory_space<vmem>>, vector<32x152xbf16>
    %cst_58 = arith.constant dense<0.000000e+00> : vector<32x256xf32>
    %103 = tpu.matmul %102, %101, %cst_58 {dimension_numbers = #tpu.dot_dimension_numbers<[1], [0], [0], [1], [0, 0, 1, 1], [], []>} : vector<32x152xbf16>, vector<152x256xbf16>, vector<32x256xf32> -> vector<32x256xf32>
    %c0_59 = arith.constant 0 : index
    %c0_60 = arith.constant 0 : index
    %104 = vector.load %arg7[%c0_59, %c0_60] : memref<32x1xf32, #tpu.memory_space<vmem>>, vector<32x1xf32>
    %105 = vector.broadcast %104 : vector<32x1xf32> to vector<32x256xf32>
    %106 = arith.addf %103, %105 : vector<32x256xf32>
    %cst_61 = arith.constant 0.000000e+00 : f32
    %107 = vector.broadcast %cst_61 : f32 to vector<32x256xf32>
    %108 = arith.maximumf %106, %107 : vector<32x256xf32>
    %c0_62 = arith.constant 0 : index
    %c0_63 = arith.constant 0 : index
    %c0_64 = arith.constant 0 : index
    %109 = vector.load %arg8[%c0_62, %c0_63, %c0_64] : memref<1x40x256xf32, #tpu.memory_space<vmem>>, vector<1x8x256xf32>
    %110 = vector.shape_cast %109 : vector<1x8x256xf32> to vector<8x256xf32>
    %111 = vector.shape_cast %10 : vector<8x256xf32> to vector<1x8x256xf32>
    tpu.vector_store %arg8[%c0_62, %c0_63, %c0_64], %111 {strides = array<i32>} : memref<1x40x256xf32, #tpu.memory_space<vmem>>, vector<1x8x256xf32>,
    %c0_65 = arith.constant 0 : index
    %c8_66 = arith.constant 8 : index
    %c0_67 = arith.constant 0 : index
    %112 = vector.load %arg8[%c0_65, %c8_66, %c0_67] : memref<1x40x256xf32, #tpu.memory_space<vmem>>, vector<1x32x256xf32>
    %113 = vector.shape_cast %112 : vector<1x32x256xf32> to vector<32x256xf32>
    %114 = vector.shape_cast %108 : vector<32x256xf32> to vector<1x32x256xf32>
    tpu.vector_store %arg8[%c0_65, %c8_66, %c0_67], %114 {strides = array<i32>} : memref<1x40x256xf32, #tpu.memory_space<vmem>>, vector<1x32x256xf32>,
    return
  }
  func.func @transform_0(%arg0: i32) -> (i32, i32, i32) {
    %c0_i32 = arith.constant 0 : i32
    %c0_i32_0 = arith.constant 0 : i32
    %c0_i32_1 = arith.constant 0 : i32
    return %arg0, %c0_i32, %c0_i32_0 : i32, i32, i32
  }
  func.func @transform_1(%arg0: i32) -> (i32, i32, i32) {
    %c0_i32 = arith.constant 0 : i32
    %c0_i32_0 = arith.constant 0 : i32
    %c0_i32_1 = arith.constant 0 : i32
    %c0_i32_2 = arith.constant 0 : i32
    return %c0_i32, %c0_i32_0, %c0_i32_1 : i32, i32, i32
  }
  func.func @transform_2(%arg0: i32) -> (i32, i32, i32) {
    %c0_i32 = arith.constant 0 : i32
    %c0_i32_0 = arith.constant 0 : i32
    %c0_i32_1 = arith.constant 0 : i32
    %c0_i32_2 = arith.constant 0 : i32
    return %c0_i32, %c0_i32_0, %c0_i32_1 : i32, i32, i32
  }
  func.func @transform_3(%arg0: i32) -> (i32, i32) {
    %c0_i32 = arith.constant 0 : i32
    %c0_i32_0 = arith.constant 0 : i32
    %c0_i32_1 = arith.constant 0 : i32
    return %c0_i32, %c0_i32_0 : i32, i32
  }
  func.func @transform_4(%arg0: i32) -> (i32, i32) {
    %c0_i32 = arith.constant 0 : i32
    %c0_i32_0 = arith.constant 0 : i32
    %c0_i32_1 = arith.constant 0 : i32
    return %c0_i32, %c0_i32_0 : i32, i32
  }
  func.func @transform_5(%arg0: i32) -> (i32, i32) {
    %c0_i32 = arith.constant 0 : i32
    %c0_i32_0 = arith.constant 0 : i32
    %c0_i32_1 = arith.constant 0 : i32
    return %c0_i32, %c0_i32_0 : i32, i32
  }
  func.func @transform_6(%arg0: i32) -> (i32, i32) {
    %c0_i32 = arith.constant 0 : i32
    %c0_i32_0 = arith.constant 0 : i32
    %c0_i32_1 = arith.constant 0 : i32
    return %c0_i32, %c0_i32_0 : i32, i32
  }
  func.func @transform_7(%arg0: i32) -> (i32, i32, i32) {
    %c0_i32 = arith.constant 0 : i32
    %c0_i32_0 = arith.constant 0 : i32
    %c0_i32_1 = arith.constant 0 : i32
    return %arg0, %c0_i32, %c0_i32_0 : i32, i32, i32
  }
}

</mosaic_0001>

<llo_original>
// kernel: tpu_custom_call.1
$region0: #{tpu_custom_call.1}
  #allocation0 [shape = 'u32[]', space=smem, size = 0x4, offset = 0x4, fixed_abs, tag = 'smem constant byte address 0x4 - core index']
  #allocation1 [shape = 'u32[72,128]{1,0:T(1,128)}', space=vmem, size = 0x9000, scoped, tag = 'internal scratch']
  %s0 = inlined_call_operand.vmem [shape: f32[2,8,256], index: 0, kind: input, shape index: {}]
  %s1 = inlined_call_operand.hbm [shape: f32[9,1,256], index: 1, kind: input, shape index: {}]
  %s2 = inlined_call_operand.hbm [shape: f32[9,1,256], index: 2, kind: input, shape index: {}]
  %s3 = inlined_call_operand.vmem [shape: bf16[24,8], index: 3, kind: input, shape index: {}]
  %s4 = inlined_call_operand.vmem [shape: f32[24,1], index: 4, kind: input, shape index: {}]
  %s5 = inlined_call_operand.vmem [shape: bf16[32,152], index: 5, kind: input, shape index: {}]
  %s6 = inlined_call_operand.vmem [shape: f32[32,1], index: 6, kind: input, shape index: {}]
  %s7 = inlined_call_operand.hbm [shape: f32[2,40,256], index: 7, kind: output, shape index: {}]
  %s8 = sld [smem:[#allocation0]]
  $region69: #{tpu_custom_call.1} parent=0
    _
  %s10 = ssub.s32 1, %s8
  %s11 = scalar_select 0, %s10, %s8
  $region1: #{tpu_custom_call.1} parent=0
    #allocation2 [shape = 'u8[9216]{0}', space=vmem, size = 0x2400, scoped, tag = 'input window, operand 1, single buffered']
    #allocation3 [shape = 's32[2]{0}', space=sflag, size = 0x8, scoped, tag = 'scoped memory for tpu_custom_call.1']
    #allocation4 [shape = 's32[2]{0}', space=sflag, size = 0x8, scoped, tag = 'scoped memory for tpu_custom_call.1']
    #allocation5 [shape = 'u8[9216]{0}', space=vmem, size = 0x2400, scoped, tag = 'input window, operand 2, single buffered']
    #allocation6 [shape = 's32[1]{0}', space=sflag, size = 0x4, scoped, tag = 'scoped memory for tpu_custom_call.1']
    #allocation7 [shape = 'u8[81920]{0}', space=vmem, size = 0x14000, scoped, tag = 'output window, operand 0']
    %12 = vsyncpa [#allocation3], 0
    %13 = vsyncpa [#allocation6], 0
    %14 = vsyncpa [#allocation4], 0
    %s15 = scalar_lea.sflag [#allocation4], 1
    %16 = vsyncpa %s15, 0
    loop: start=0, step=1, limit=4
    $region2: #{tpu_custom_call.1} parent=1 // loop_pre_header
      _
    $region3: #{tpu_custom_call.1} parent=1 // loop_header
      %s18 = sphi 0, %s22
      %p19 = scmp.ge.s32.totalorder %s18, 4
      %s28 = sphi 0, %s30
      %s31 = sphi 0, %s28
      %s32 = sphi 0, %s31
      %s48 = sphi 0, %s32
      %s52 = sphi 0, %s52
      %s54 = sphi 0, %s52
      %s55 = sphi 0, %s54
      %s69 = sphi 0, %s55
      %s73 = sphi 0, %s73
      %s75 = sphi 0, %s73
      %s76 = sphi 0, %s75
      %s90 = sphi 0, %s76
      %s94 = sphi 0, %s94
      %s96 = sphi 0, %s94
      %s97 = sphi 0, %s96
      %s111 = sphi 0, %s97
      %s115 = sphi 0, %s115
      %s117 = sphi 0, %s115
      %s118 = sphi 0, %s117
      %s132 = sphi 0, %s118
      %s136 = sphi 0, %s136
      %s138 = sphi 0, %s136
      %s139 = sphi 0, %s138
      %s153 = sphi 0, %s139
      %s157 = sphi 0, %s157
      %s159 = sphi 0, %s157
      %s160 = sphi 0, %s159
      %s174 = sphi 0, %s160
      %s180 = sphi 0, %s182
      %s183 = sphi 0, %s180
      %s184 = sphi 0, %s183
      %s200 = sphi 0, %s184
    $region4: #{tpu_custom_call.1} parent=1 // loop_header_branch
      %21 = sbr.rel (%p19) target = $region8
    $region5: #{tpu_custom_call.1} parent=1 // loop_body
      %s23 = ssub.s32 %s18, 1
      %s24 = ssub.s32 %s18, 2
      %s25 = sadd.s32 %s18, 1
      %s26 = ssub.s32 %s18, %s25
      %p27 = scmp.eq.s32.totalorder %s26, 0
      %s29 = sadd.s32 %s28, 1
      %s30 = scalar_select %p27, %s28, %s29
      %p33 = pneg %p27
      %p34 = scmp.eq.s32.totalorder %s18, 1
      %p35 = por %p33, %p34
      %p36 = scmp.ne.s32.totalorder %s28, %s31
      %p37 = scmp.eq.s32.totalorder %s18, 0
      %p38 = por %p36, %p37
      %p39 = scmp.ne.s32.totalorder %s28, %s31
      %p40 = scmp.eq.s32.totalorder %s23, 1
      %p41 = por %p39, %p40
      %p42 = scmp.ne.s32.totalorder %s31, %s32
      %p43 = scmp.eq.s32.totalorder %s23, 0
      %p44 = por %p42, %p43
      %p45 = scmp.ne.s32.totalorder %s31, %s32
      %p46 = scmp.eq.s32.totalorder %s24, 1
      %p47 = por %p45, %p46
      %p49 = scmp.ne.s32.totalorder %s32, %s48
      %p50 = scmp.eq.s32.totalorder %s24, 0
      %p51 = por %p49, %p50
      %s53 = sadd.s32 %s52, 1
      %p56 = scmp.eq.s32.totalorder %s18, 1
      %p57 = scmp.ne.s32.totalorder %s52, %s54
      %p58 = scmp.eq.s32.totalorder %s18, 0
      %p59 = por %p57, %p58
      %p60 = scmp.ne.s32.totalorder %s52, %s54
      %p61 = scmp.eq.s32.totalorder %s23, 1
      %p62 = por %p60, %p61
      %p63 = scmp.ne.s32.totalorder %s54, %s55
      %p64 = scmp.eq.s32.totalorder %s23, 0
      %p65 = por %p63, %p64
      %p66 = scmp.ne.s32.totalorder %s54, %s55
      %p67 = scmp.eq.s32.totalorder %s24, 1
      %p68 = por %p66, %p67
      %p70 = scmp.ne.s32.totalorder %s55, %s69
      %p71 = scmp.eq.s32.totalorder %s24, 0
      %p72 = por %p70, %p71
      %s74 = sadd.s32 %s73, 1
      %p77 = scmp.eq.s32.totalorder %s18, 1
      %p78 = scmp.ne.s32.totalorder %s73, %s75
      %p79 = scmp.eq.s32.totalorder %s18, 0
      %p80 = por %p78, %p79
      %p81 = scmp.ne.s32.totalorder %s73, %s75
      %p82 = scmp.eq.s32.totalorder %s23, 1
      %p83 = por %p81, %p82
      %p84 = scmp.ne.s32.totalorder %s75, %s76
      %p85 = scmp.eq.s32.totalorder %s23, 0
      %p86 = por %p84, %p85
      %p87 = scmp.ne.s32.totalorder %s75, %s76
      %p88 = scmp.eq.s32.totalorder %s24, 1
      %p89 = por %p87, %p88
      %p91 = scmp.ne.s32.totalorder %s76, %s90
      %p92 = scmp.eq.s32.totalorder %s24, 0
      %p93 = por %p91, %p92
      %s95 = sadd.s32 %s94, 1
      %p98 = scmp.eq.s32.totalorder %s18, 1
      %p99 = scmp.ne.s32.totalorder %s94, %s96
      %p100 = scmp.eq.s32.totalorder %s18, 0
      %p101 = por %p99, %p100
      %p102 = scmp.ne.s32.totalorder %s94, %s96
      %p103 = scmp.eq.s32.totalorder %s23, 1
      %p104 = por %p102, %p103
      %p105 = scmp.ne.s32.totalorder %s96, %s97
      %p106 = scmp.eq.s32.totalorder %s23, 0
      %p107 = por %p105, %p106
      %p108 = scmp.ne.s32.totalorder %s96, %s97
      %p109 = scmp.eq.s32.totalorder %s24, 1
      %p110 = por %p108, %p109
      %p112 = scmp.ne.s32.totalorder %s97, %s111
      %p113 = scmp.eq.s32.totalorder %s24, 0
      %p114 = por %p112, %p113
      %s116 = sadd.s32 %s115, 1
      %p119 = scmp.eq.s32.totalorder %s18, 1
      %p120 = scmp.ne.s32.totalorder %s115, %s117
      %p121 = scmp.eq.s32.totalorder %s18, 0
      %p122 = por %p120, %p121
      %p123 = scmp.ne.s32.totalorder %s115, %s117
      %p124 = scmp.eq.s32.totalorder %s23, 1
      %p125 = por %p123, %p124
      %p126 = scmp.ne.s32.totalorder %s117, %s118
      %p127 = scmp.eq.s32.totalorder %s23, 0
      %p128 = por %p126, %p127
      %p129 = scmp.ne.s32.totalorder %s117, %s118
      %p130 = scmp.eq.s32.totalorder %s24, 1
      %p131 = por %p129, %p130
      %p133 = scmp.ne.s32.totalorder %s118, %s132
      %p134 = scmp.eq.s32.totalorder %s24, 0
      %p135 = por %p133, %p134
      %s137 = sadd.s32 %s136, 1
      %p140 = scmp.eq.s32.totalorder %s18, 1
      %p141 = scmp.ne.s32.totalorder %s136, %s138
      %p142 = scmp.eq.s32.totalorder %s18, 0
      %p143 = por %p141, %p142
      %p144 = scmp.ne.s32.totalorder %s136, %s138
      %p145 = scmp.eq.s32.totalorder %s23, 1
      %p146 = por %p144, %p145
      %p147 = scmp.ne.s32.totalorder %s138, %s139
      %p148 = scmp.eq.s32.totalorder %s23, 0
      %p149 = por %p147, %p148
      %p150 = scmp.ne.s32.totalorder %s138, %s139
      %p151 = scmp.eq.s32.totalorder %s24, 1
      %p152 = por %p150, %p151
      %p154 = scmp.ne.s32.totalorder %s139, %s153
      %p155 = scmp.eq.s32.totalorder %s24, 0
      %p156 = por %p154, %p155
      %s158 = sadd.s32 %s157, 1
      %p161 = scmp.eq.s32.totalorder %s18, 1
      %p162 = scmp.ne.s32.totalorder %s157, %s159
      %p163 = scmp.eq.s32.totalorder %s18, 0
      %p164 = por %p162, %p163
      %p165 = scmp.ne.s32.totalorder %s157, %s159
      %p166 = scmp.eq.s32.totalorder %s23, 1
      %p167 = por %p165, %p166
      %p168 = scmp.ne.s32.totalorder %s159, %s160
      %p169 = scmp.eq.s32.totalorder %s23, 0
      %p170 = por %p168, %p169
      %p171 = scmp.ne.s32.totalorder %s159, %s160
      %p172 = scmp.eq.s32.totalorder %s24, 1
      %p173 = por %p171, %p172
      %p175 = scmp.ne.s32.totalorder %s160, %s174
      %p176 = scmp.eq.s32.totalorder %s24, 0
      %p177 = por %p175, %p176
      %s178 = ssub.s32 %s18, %s25
      %p179 = scmp.eq.s32.totalorder %s178, 0
      %s181 = sadd.s32 %s180, 1
      %s182 = scalar_select %p179, %s180, %s181
      %p185 = pneg %p179
      %p186 = scmp.eq.s32.totalorder %s18, 1
      %p187 = por %p185, %p186
      %p188 = scmp.ne.s32.totalorder %s180, %s183
      %p189 = scmp.eq.s32.totalorder %s18, 0
      %p190 = por %p188, %p189
      %p191 = scmp.ne.s32.totalorder %s180, %s183
      %p192 = scmp.eq.s32.totalorder %s23, 1
      %p193 = por %p191, %p192
      %p194 = scmp.ne.s32.totalorder %s183, %s184
      %p195 = scmp.eq.s32.totalorder %s23, 0
      %p196 = por %p194, %p195
      %p197 = scmp.ne.s32.totalorder %s183, %s184
      %p198 = scmp.eq.s32.totalorder %s24, 1
      %p199 = por %p197, %p198
      %p201 = scmp.ne.s32.totalorder %s184, %s200
      %p202 = scmp.eq.s32.totalorder %s24, 0
      %p203 = por %p201, %p202
      %p204 = scmp.le.s32.totalorder 1, %s18
      %p205 = scmp.lt.s32.totalorder %s18, 3
      %p206 = pnand %p204, %p205
      %p207 = pneg %p206
      // Predicated region
      $region9: #{tpu_custom_call.1} parent=5 // pred_check
        _
      $region10: #{tpu_custom_call.1} parent=5 // pred_check_branch
        %209 = sbr.rel (%p206) target = $region12
      $region11: #{tpu_custom_call.1} parent=5 // pred_region
        %s210 = ssub.s32 %s18, 1
        // Predicated region
        $region13: #{tpu_custom_call.1} parent=11 // pred_check
          %p211 = pneg %p65
        $region14: #{tpu_custom_call.1} parent=11 // pred_check_branch
          %213 = sbr.rel (%p211) target = $region16
        $region15: #{tpu_custom_call.1} parent=11 // pred_region
          %215 = vsyncadd [#allocation3], 0
          %s216 = sshll.u32 %s1, 4
          %s217 = int_to_ptr.hbm [resolvable:$true] %s216
          %s218 = sshll.u32 [#allocation2], 4
          %s219 = int_to_ptr.vmem [resolvable:$true] %s218
          %224 = dma.hbm_to_vmem [thread:$0]  %s217, 288, %s219, [#allocation3], 32, 32, 2
        $region16: #{tpu_custom_call.1} parent=11 // pred_fallthru
          _
        // Predicated region
        $region17: #{tpu_custom_call.1} parent=11 // pred_check
          %p225 = pneg %p86
        $region18: #{tpu_custom_call.1} parent=11 // pred_check_branch
          %227 = sbr.rel (%p225) target = $region20
        $region19: #{tpu_custom_call.1} parent=11 // pred_region
          %229 = vsyncadd [#allocation6], 0
          %s230 = sshll.u32 %s2, 4
          %s231 = int_to_ptr.hbm [resolvable:$true] %s230
          %s232 = sshll.u32 [#allocation5], 4
          %s233 = int_to_ptr.vmem [resolvable:$true] %s232
          %238 = dma.hbm_to_vmem [thread:$0]  %s231, 288, %s233, [#allocation6], 32, 32, 2
        $region20: #{tpu_custom_call.1} parent=11 // pred_fallthru
          _
        // Predicated region
        $region21: #{tpu_custom_call.1} parent=11 // pred_check
          %p239 = pneg %p107
        $region22: #{tpu_custom_call.1} parent=11 // pred_check_branch
          %241 = sbr.rel (%p239) target = $region24
        $region23: #{tpu_custom_call.1} parent=11 // pred_region
          _
        $region24: #{tpu_custom_call.1} parent=11 // pred_fallthru
          _
        // Predicated region
        $region25: #{tpu_custom_call.1} parent=11 // pred_check
          %p242 = pneg %p128
        $region26: #{tpu_custom_call.1} parent=11 // pred_check_branch
          %244 = sbr.rel (%p242) target = $region28
        $region27: #{tpu_custom_call.1} parent=11 // pred_region
          _
        $region28: #{tpu_custom_call.1} parent=11 // pred_fallthru
          _
        // Predicated region
        $region29: #{tpu_custom_call.1} parent=11 // pred_check
          %p245 = pneg %p149
        $region30: #{tpu_custom_call.1} parent=11 // pred_check_branch
          %247 = sbr.rel (%p245) target = $region32
        $region31: #{tpu_custom_call.1} parent=11 // pred_region
          _
        $region32: #{tpu_custom_call.1} parent=11 // pred_fallthru
          _
        // Predicated region
        $region33: #{tpu_custom_call.1} parent=11 // pred_check
          %p248 = pneg %p170
        $region34: #{tpu_custom_call.1} parent=11 // pred_check_branch
          %250 = sbr.rel (%p248) target = $region36
        $region35: #{tpu_custom_call.1} parent=11 // pred_region
          _
        $region36: #{tpu_custom_call.1} parent=11 // pred_fallthru
          _
      $region12: #{tpu_custom_call.1} parent=5 // pred_fallthru
        _
      %p251 = scmp.lt.s32.totalorder %s18, 2
      // Predicated region
      $region37: #{tpu_custom_call.1} parent=5 // pred_check
        %p252 = pneg %p251
      $region38: #{tpu_custom_call.1} parent=5 // pred_check_branch
        %254 = sbr.rel (%p252) target = $region40
      $region39: #{tpu_custom_call.1} parent=5 // pred_region
        // Predicated region
        $region41: #{tpu_custom_call.1} parent=39 // pred_check
          %p255 = pneg %p38
        $region42: #{tpu_custom_call.1} parent=39 // pred_check_branch
          %257 = sbr.rel (%p255) target = $region44
        $region43: #{tpu_custom_call.1} parent=39 // pred_region
          %p258 = scmp.lt.s32.totalorder %s18, 1
          %s259 = scalar_select %p258, %s18, 1
          %s260 = smul.addr %s259, 2
          %s261 = smul.addr %s260, 8
          %s262 = scalar_lea.vmem %s0, %s261
        $region44: #{tpu_custom_call.1} parent=39 // pred_fallthru
          _
      $region40: #{tpu_custom_call.1} parent=5 // pred_fallthru
        _
      %p263 = scmp.le.s32.totalorder 1, %s18
      %p264 = scmp.lt.s32.totalorder %s18, 3
      %p265 = pnand %p263, %p264
      %p266 = pneg %p265
      // Predicated region
      $region45: #{tpu_custom_call.1} parent=5 // pred_check
        _
      $region46: #{tpu_custom_call.1} parent=5 // pred_check_branch
        %268 = sbr.rel (%p265) target = $region48
      $region47: #{tpu_custom_call.1} parent=5 // pred_region
        %s269 = ssub.s32 %s18, 1
        // Predicated region
        $region49: #{tpu_custom_call.1} parent=47 // pred_check
          %p270 = pneg %p65
        $region50: #{tpu_custom_call.1} parent=47 // pred_check_branch
          %272 = sbr.rel (%p270) target = $region52
        $region51: #{tpu_custom_call.1} parent=47 // pred_region
          %274 = dma.done [#allocation3], 288
        $region52: #{tpu_custom_call.1} parent=47 // pred_fallthru
          _
        // Predicated region
        $region53: #{tpu_custom_call.1} parent=47 // pred_check
          %p275 = pneg %p86
        $region54: #{tpu_custom_call.1} parent=47 // pred_check_branch
          %277 = sbr.rel (%p275) target = $region56
        $region55: #{tpu_custom_call.1} parent=47 // pred_region
          %279 = dma.done [#allocation6], 288
        $region56: #{tpu_custom_call.1} parent=47 // pred_fallthru
          _
        %p280 = scmp.lt.s32.totalorder %s23, 1
        %s281 = scalar_select %p280, %s23, 1
        %s282 = smul.addr %s281, 2
        %s283 = smul.addr %s282, 8
        %s284 = scalar_lea.vmem %s0, %s283
        %p285 = pneg %p44
        %p286 = pneg %p41
        %p287 = pneg %p65
        %p288 = pneg %p62
        %p289 = pneg %p86
        %p290 = pneg %p83
        %p291 = pneg %p107
        %p292 = pneg %p104
        %p293 = pneg %p128
        %p294 = pneg %p125
        %p295 = pneg %p149
        %p296 = pneg %p146
        %p297 = pneg %p170
        %p298 = pneg %p167
        %p299 = pneg %p196
        %p300 = pneg %p193
        %s301 = sand.u32 %s183, 1
        %s302 = scalar_lea.sflag [#allocation4], %s301
        %s303 = sand.u32 %s183, 1
        %s304 = smul.addr %s303, 80
        %s305 = scalar_lea.vmem [#allocation7], %s304
        %p306 = scmp.lt.s32.totalorder %s23, 1
        %s307 = scalar_select %p306, %s23, 1
        %s308 = smul.addr %s307, 2
        %s309 = smul.addr %s308, 8
        %s310 = scalar_lea.vmem %s0, %s309
        %v312 = vld [vmem:[%s310] sm:$0xff]
        %v313 = vld [vmem:[%s310 + $0x8] sm:$0xff]
        %v314 = vpack.c.bf16 %v312, %v312
        %v315 = vpack.c.bf16 %v313, %v313
        %v316 = vld [vmem:[%s3] sm:$0xf]
        %v317 = vld [vmem:[%s3 + $0x4] sm:$0xf]
        %v318 = vld [vmem:[%s3 + $0x8] sm:$0xf]
        %v319 = vld [vmem:[%s4] sm:$0xff]
        %v320 = vld [vmem:[%s4 + $0x8] sm:$0xff]
        %v321 = vld [vmem:[%s4 + $0x10] sm:$0xff]
        %323 = vset.pattern.permute.xlu0 0
        %324 = vperm.xlu0 %323, %v319
        %v325 = vpop.permute.xlu0 %324
        %328 = vset.pattern.permute.xlu0 0
        %329 = vperm.xlu0 %328, %v320
        %v330 = vpop.permute.xlu0 %329
        %333 = vset.pattern.permute.xlu0 0
        %334 = vperm.xlu0 %333, %v321
        %v335 = vpop.permute.xlu0 %334
        %v340 = vunpack.c.l.b16 %v316
        %v341 = vunpack.c.l.b16 %v317
        %v342 = vunpack.c.l.b16 %v318
        %v343 = vpack.c.b16 %v341, %v340
        %v344 = vpack.c.b16 %v342, %v342
        %vm345 = vcmask 64512
        %v347 = vsel %vm345, %v343, 0
        %v350 = vsel %vm345, %v344, 0
        %vm352 = vcmask 1043456
        %v354 = vsel %vm352, %v314, 0
        %v357 = vsel %vm352, %v315, 0
        %359 = vmatpush.bf16.msra.mxu0 0
        %360 = vmatpush.bf16.msra.mxu0 0
        %361 = vmatpush.bf16.msra.mxu0 0
        %362 = vmatpush.bf16.msra.mxu0 0
        %363 = vmatpush.bf16.msra.mxu0 0
        %364 = vmatpush.bf16.msra.mxu0 0
        %365 = vmatpush.bf16.msra.mxu0 0
        %366 = vmatpush.bf16.msra.mxu0 %v354
        %367 = vmatmul.bf16.gmra.mxu0 %v347
        %v368 = vpop.f32.mrf.mxu0
        %v369 = vadd.f32 %v325, %v368
        %v370 = vpop.f32.mrf.mxu0
        %v371 = vadd.f32 %v330, %v370
        %372 = vmatmul.bf16.gmra.mxu0 %v350
        %v373 = vpop.f32.mrf.mxu0
        %v374 = vadd.f32 %v335, %v373
        %v375 = vpop.f32.mrf.mxu0
        %376 = vdwg.mxu0
        %377 = vmatpush.bf16.msra.mxu0 0
        %378 = vmatpush.bf16.msra.mxu0 0
        %379 = vmatpush.bf16.msra.mxu0 0
        %380 = vmatpush.bf16.msra.mxu0 0
        %381 = vmatpush.bf16.msra.mxu0 0
        %382 = vmatpush.bf16.msra.mxu0 0
        %383 = vmatpush.bf16.msra.mxu0 0
        %384 = vmatpush.bf16.msra.mxu0 %v357
        %385 = vmatmul.bf16.gmra.mxu0 %v347
        %v386 = vpop.f32.mrf.mxu0
        %v387 = vadd.f32 %v325, %v386
        %v388 = vpop.f32.mrf.mxu0
        %v389 = vadd.f32 %v330, %v388
        %390 = vmatmul.bf16.gmra.mxu0 %v350
        %v391 = vpop.f32.mrf.mxu0
        %v392 = vadd.f32 %v335, %v391
        %v393 = vpop.f32.mrf.mxu0
        %394 = vdwg.mxu0
        %v395 = vmax.f32 %v369, 0.0
        %v396 = vmax.f32 %v387, 0.0
        %v397 = vmax.f32 %v371, 0.0
        %v398 = vmax.f32 %v389, 0.0
        %v399 = vmax.f32 %v374, 0.0
        %v400 = vmax.f32 %v392, 0.0
        %401 = vrot.lane.b32.xlu0 %v397, 17
        %v402 = vpop.permute.xlu0 %401
        %403 = vrot.lane.b32.xlu0 %v399, 17
        %v404 = vpop.permute.xlu0 %403
        %405 = vrot.lane.b32.xlu0 %v398, 17
        %v406 = vpop.permute.xlu0 %405
        %407 = vrot.lane.b32.xlu0 %v400, 17
        %v408 = vpop.permute.xlu0 %407
        %v409 = vlaneseq
        %v410 = vand.u32 %v409, 127
        %vm411 = vcmp.lt.s32.totalorder %v410, 17
        %v412 = vsel %vm411, %v402, %v406
        %v413 = vsel %vm411, %v404, %v408
        %v414 = vsel %vm411, %v406, %v402
        %v415 = vsel %vm411, %v408, %v404
        %416 = vrot.lane.b32.xlu0 %v312, 17
        %v417 = vpop.permute.xlu0 %416
        %418 = vrot.lane.b32.xlu0 %v313, 17
        %v419 = vpop.permute.xlu0 %418
        %v420 = vsel %vm411, %v417, %v419
        %v421 = vsel %vm411, %v419, %v417
        %v422 = vld [vmem:[#allocation2] sm:$0x3]
        %v424 = vperm.slane %v422, 0
        %v425 = vperm.slane %v422, 1
        %v428 = vmul.f32 %v414, %v424
        %v429 = vmul.f32 %v412, %v425
        %v430 = vmul.f32 %v415, %v424
        %v431 = vmul.f32 %v413, %v425
        %v432 = vld [vmem:[#allocation5] sm:$0x3]
        %v434 = vperm.slane %v432, 0
        %v435 = vperm.slane %v432, 1
        %v438 = vadd.f32 %v421, %v434
        %v439 = vadd.f32 %v420, %v435
        %v440 = vmax.f32 %v312, %v438
        %v441 = vmax.f32 %v313, %v439
        %442 = vrot.lane.b32.xlu0 %v397, 16
        %v443 = vpop.permute.xlu0 %442
        %444 = vrot.lane.b32.xlu0 %v399, 16
        %v445 = vpop.permute.xlu0 %444
        %446 = vrot.lane.b32.xlu0 %v398, 16
        %v447 = vpop.permute.xlu0 %446
        %448 = vrot.lane.b32.xlu0 %v400, 16
        %v449 = vpop.permute.xlu0 %448
        %vm450 = vcmp.lt.s32.totalorder %v410, 16
        %v451 = vsel %vm450, %v443, %v447
        %v452 = vsel %vm450, %v445, %v449
        %v453 = vsel %vm450, %v447, %v443
        %v454 = vsel %vm450, %v449, %v445
        %455 = vrot.lane.b32.xlu0 %v312, 16
        %v456 = vpop.permute.xlu0 %455
        %457 = vrot.lane.b32.xlu0 %v313, 16
        %v458 = vpop.permute.xlu0 %457
        %v459 = vsel %vm450, %v456, %v458
        %v460 = vsel %vm450, %v458, %v456
        %s461 = scalar_lea.vmem [#allocation2], 2
        %v462 = vld [vmem:[%s461] sm:$0x3]
        %v464 = vperm.slane %v462, 0
        %v465 = vperm.slane %v462, 1
        %v468 = vmul.f32 %v453, %v464
        %v469 = vmul.f32 %v451, %v465
        %v470 = vmul.f32 %v454, %v464
        %v471 = vmul.f32 %v452, %v465
        %s472 = scalar_lea.vmem [#allocation5], 2
        %v473 = vld [vmem:[%s472] sm:$0x3]
        %v475 = vperm.slane %v473, 0
        %v476 = vperm.slane %v473, 1
        %v479 = vadd.f32 %v460, %v475
        %v480 = vadd.f32 %v459, %v476
        %v481 = vmax.f32 %v440, %v479
        %v482 = vmax.f32 %v441, %v480
        %483 = vrot.lane.b32.xlu0 %v397, 15
        %v484 = vpop.permute.xlu0 %483
        %485 = vrot.lane.b32.xlu0 %v399, 15
        %v486 = vpop.permute.xlu0 %485
        %487 = vrot.lane.b32.xlu0 %v398, 15
        %v488 = vpop.permute.xlu0 %487
        %489 = vrot.lane.b32.xlu0 %v400, 15
        %v490 = vpop.permute.xlu0 %489
        %vm491 = vcmp.lt.s32.totalorder %v410, 15
        %v492 = vsel %vm491, %v484, %v488
        %v493 = vsel %vm491, %v486, %v490
        %v494 = vsel %vm491, %v488, %v484
        %v495 = vsel %vm491, %v490, %v486
        %496 = vrot.lane.b32.xlu0 %v312, 15
        %v497 = vpop.permute.xlu0 %496
        %498 = vrot.lane.b32.xlu0 %v313, 15
        %v499 = vpop.permute.xlu0 %498
        %v500 = vsel %vm491, %v497, %v499
        %v501 = vsel %vm491, %v499, %v497
        %s502 = scalar_lea.vmem [#allocation2], 4
        %v503 = vld [vmem:[%s502] sm:$0x3]
        %v505 = vperm.slane %v503, 0
        %v506 = vperm.slane %v503, 1
        %v509 = vmul.f32 %v494, %v505
        %v510 = vmul.f32 %v492, %v506
        %v511 = vmul.f32 %v495, %v505
        %v512 = vmul.f32 %v493, %v506
        %s513 = scalar_lea.vmem [#allocation5], 4
        %v514 = vld [vmem:[%s513] sm:$0x3]
        %v516 = vperm.slane %v514, 0
        %v517 = vperm.slane %v514, 1
        %v520 = vadd.f32 %v501, %v516
        %v521 = vadd.f32 %v500, %v517
        %v522 = vmax.f32 %v481, %v520
        %v523 = vmax.f32 %v482, %v521
        %524 = vrot.lane.b32.xlu0 %v397, 1
        %v525 = vpop.permute.xlu0 %524
        %526 = vrot.lane.b32.xlu0 %v399, 1
        %v527 = vpop.permute.xlu0 %526
        %528 = vrot.lane.b32.xlu0 %v398, 1
        %v529 = vpop.permute.xlu0 %528
        %530 = vrot.lane.b32.xlu0 %v400, 1
        %v531 = vpop.permute.xlu0 %530
        %vm532 = vcmp.lt.s32.totalorder %v410, 1
        %v533 = vsel %vm532, %v525, %v529
        %v534 = vsel %vm532, %v527, %v531
        %v535 = vsel %vm532, %v529, %v525
        %v536 = vsel %vm532, %v531, %v527
        %537 = vrot.lane.b32.xlu0 %v312, 1
        %v538 = vpop.permute.xlu0 %537
        %539 = vrot.lane.b32.xlu0 %v313, 1
        %v540 = vpop.permute.xlu0 %539
        %v541 = vsel %vm532, %v538, %v540
        %v542 = vsel %vm532, %v540, %v538
        %s543 = scalar_lea.vmem [#allocation2], 6
        %v544 = vld [vmem:[%s543] sm:$0x3]
        %v546 = vperm.slane %v544, 0
        %v547 = vperm.slane %v544, 1
        %v550 = vmul.f32 %v535, %v546
        %v551 = vmul.f32 %v533, %v547
        %v552 = vmul.f32 %v536, %v546
        %v553 = vmul.f32 %v534, %v547
        %s554 = scalar_lea.vmem [#allocation5], 6
        %v555 = vld [vmem:[%s554] sm:$0x3]
        %v557 = vperm.slane %v555, 0
        %v558 = vperm.slane %v555, 1
        %v561 = vadd.f32 %v542, %v557
        %v562 = vadd.f32 %v541, %v558
        %v563 = vmax.f32 %v522, %v561
        %v564 = vmax.f32 %v523, %v562
        %565 = vrot.lane.b32.xlu0 %v397, 127
        %v566 = vpop.permute.xlu0 %565
        %567 = vrot.lane.b32.xlu0 %v399, 127
        %v568 = vpop.permute.xlu0 %567
        %569 = vrot.lane.b32.xlu0 %v398, 127
        %v570 = vpop.permute.xlu0 %569
        %571 = vrot.lane.b32.xlu0 %v400, 127
        %v572 = vpop.permute.xlu0 %571
        %vm573 = vcmp.lt.s32.totalorder %v410, 127
        %v574 = vsel %vm573, %v566, %v570
        %v575 = vsel %vm573, %v568, %v572
        %v576 = vsel %vm573, %v570, %v566
        %v577 = vsel %vm573, %v572, %v568
        %578 = vrot.lane.b32.xlu0 %v312, 127
        %v579 = vpop.permute.xlu0 %578
        %580 = vrot.lane.b32.xlu0 %v313, 127
        %v581 = vpop.permute.xlu0 %580
        %v582 = vsel %vm573, %v579, %v581
        %v583 = vsel %vm573, %v581, %v579
        %s584 = scalar_lea.vmem [#allocation2], 10
        %v585 = vld [vmem:[%s584] sm:$0x3]
        %v587 = vperm.slane %v585, 0
        %v588 = vperm.slane %v585, 1
        %v591 = vmul.f32 %v574, %v587
        %v592 = vmul.f32 %v576, %v588
        %v593 = vmul.f32 %v575, %v587
        %v594 = vmul.f32 %v577, %v588
        %s595 = scalar_lea.vmem [#allocation5], 10
        %v596 = vld [vmem:[%s595] sm:$0x3]
        %v598 = vperm.slane %v596, 0
        %v599 = vperm.slane %v596, 1
        %v602 = vadd.f32 %v582, %v598
        %v603 = vadd.f32 %v583, %v599
        %v604 = vmax.f32 %v563, %v602
        %v605 = vmax.f32 %v564, %v603
        %606 = vrot.lane.b32.xlu0 %v397, 113
        %v607 = vpop.permute.xlu0 %606
        %608 = vrot.lane.b32.xlu0 %v399, 113
        %v609 = vpop.permute.xlu0 %608
        %610 = vrot.lane.b32.xlu0 %v398, 113
        %v611 = vpop.permute.xlu0 %610
        %612 = vrot.lane.b32.xlu0 %v400, 113
        %v613 = vpop.permute.xlu0 %612
        %vm614 = vcmp.lt.s32.totalorder %v410, 113
        %v615 = vsel %vm614, %v607, %v611
        %v616 = vsel %vm614, %v609, %v613
        %v617 = vsel %vm614, %v611, %v607
        %v618 = vsel %vm614, %v613, %v609
        %619 = vrot.lane.b32.xlu0 %v312, 113
        %v620 = vpop.permute.xlu0 %619
        %621 = vrot.lane.b32.xlu0 %v313, 113
        %v622 = vpop.permute.xlu0 %621
        %v623 = vsel %vm614, %v620, %v622
        %v624 = vsel %vm614, %v622, %v620
        %s625 = scalar_lea.vmem [#allocation2], 12
        %v626 = vld [vmem:[%s625] sm:$0x3]
        %v628 = vperm.slane %v626, 0
        %v629 = vperm.slane %v626, 1
        %v632 = vmul.f32 %v615, %v628
        %v633 = vmul.f32 %v617, %v629
        %v634 = vmul.f32 %v616, %v628
        %v635 = vmul.f32 %v618, %v629
        %s636 = scalar_lea.vmem [#allocation5], 12
        %v637 = vld [vmem:[%s636] sm:$0x3]
        %v639 = vperm.slane %v637, 0
        %v640 = vperm.slane %v637, 1
        %v643 = vadd.f32 %v623, %v639
        %v644 = vadd.f32 %v624, %v640
        %v645 = vmax.f32 %v604, %v643
        %v646 = vmax.f32 %v605, %v644
        %647 = vrot.lane.b32.xlu0 %v397, 112
        %v648 = vpop.permute.xlu0 %647
        %649 = vrot.lane.b32.xlu0 %v399, 112
        %v650 = vpop.permute.xlu0 %649
        %651 = vrot.lane.b32.xlu0 %v398, 112
        %v652 = vpop.permute.xlu0 %651
        %653 = vrot.lane.b32.xlu0 %v400, 112
        %v654 = vpop.permute.xlu0 %653
        %vm655 = vcmp.lt.s32.totalorder %v410, 112
        %v656 = vsel %vm655, %v648, %v652
        %v657 = vsel %vm655, %v650, %v654
        %v658 = vsel %vm655, %v652, %v648
        %v659 = vsel %vm655, %v654, %v650
        %660 = vrot.lane.b32.xlu0 %v312, 112
        %v661 = vpop.permute.xlu0 %660
        %662 = vrot.lane.b32.xlu0 %v313, 112
        %v663 = vpop.permute.xlu0 %662
        %v664 = vsel %vm655, %v661, %v663
        %v665 = vsel %vm655, %v663, %v661
        %s666 = scalar_lea.vmem [#allocation2], 14
        %v667 = vld [vmem:[%s666] sm:$0x3]
        %v669 = vperm.slane %v667, 0
        %v670 = vperm.slane %v667, 1
        %v673 = vmul.f32 %v656, %v669
        %v674 = vmul.f32 %v658, %v670
        %v675 = vmul.f32 %v657, %v669
        %v676 = vmul.f32 %v659, %v670
        %s677 = scalar_lea.vmem [#allocation5], 14
        %v678 = vld [vmem:[%s677] sm:$0x3]
        %v680 = vperm.slane %v678, 0
        %v681 = vperm.slane %v678, 1
        %v684 = vadd.f32 %v664, %v680
        %v685 = vadd.f32 %v665, %v681
        %v686 = vmax.f32 %v645, %v684
        %v687 = vmax.f32 %v646, %v685
        %688 = vrot.lane.b32.xlu0 %v397, 111
        %v689 = vpop.permute.xlu0 %688
        %690 = vrot.lane.b32.xlu0 %v399, 111
        %v691 = vpop.permute.xlu0 %690
        %692 = vrot.lane.b32.xlu0 %v398, 111
        %v693 = vpop.permute.xlu0 %692
        %694 = vrot.lane.b32.xlu0 %v400, 111
        %v695 = vpop.permute.xlu0 %694
        %vm696 = vcmp.lt.s32.totalorder %v410, 111
        %v697 = vsel %vm696, %v689, %v693
        %v698 = vsel %vm696, %v691, %v695
        %v699 = vsel %vm696, %v693, %v689
        %v700 = vsel %vm696, %v695, %v691
        %701 = vrot.lane.b32.xlu0 %v312, 111
        %v702 = vpop.permute.xlu0 %701
        %703 = vrot.lane.b32.xlu0 %v313, 111
        %v704 = vpop.permute.xlu0 %703
        %v705 = vsel %vm696, %v702, %v704
        %v706 = vsel %vm696, %v704, %v702
        %s707 = scalar_lea.vmem [#allocation2], 16
        %v708 = vld [vmem:[%s707] sm:$0x3]
        %v710 = vperm.slane %v708, 0
        %v711 = vperm.slane %v708, 1
        %v714 = vmul.f32 %v697, %v710
        %v715 = vmul.f32 %v699, %v711
        %v716 = vmul.f32 %v698, %v710
        %v717 = vmul.f32 %v700, %v711
        %s718 = scalar_lea.vmem [#allocation5], 16
        %v719 = vld [vmem:[%s718] sm:$0x3]
        %v721 = vperm.slane %v719, 0
        %v722 = vperm.slane %v719, 1
        %v725 = vadd.f32 %v705, %v721
        %v726 = vadd.f32 %v706, %v722
        %v727 = vmax.f32 %v686, %v725
        %v728 = vmax.f32 %v687, %v726
        %v729 = vpack.c.bf16 %v430, %v428
        %v730 = vpack.c.bf16 %v431, %v429
        %v731 = vpack.c.bf16 %v470, %v468
        %v732 = vpack.c.bf16 %v471, %v469
        %v733 = vpack.c.bf16 %v511, %v509
        %v734 = vpack.c.bf16 %v512, %v510
        %v735 = vpack.c.bf16 %v552, %v550
        %v736 = vpack.c.bf16 %v553, %v551
        %v737 = vpack.c.bf16 %v399, %v397
        %v738 = vpack.c.bf16 %v400, %v398
        %v739 = vpack.c.bf16 %v593, %v591
        %v740 = vpack.c.bf16 %v594, %v592
        %v741 = vpack.c.bf16 %v634, %v632
        %v742 = vpack.c.bf16 %v635, %v633
        %v743 = vpack.c.bf16 %v675, %v673
        %v744 = vpack.c.bf16 %v676, %v674
        %v745 = vpack.c.bf16 %v716, %v714
        %v746 = vpack.c.bf16 %v717, %v715
        %v747 = vpack.c.bf16 %v727, %v727
        %v748 = vpack.c.bf16 %v728, %v728
        %v749 = vld [vmem:[%s5] sm:$0xff]
        %v750 = vld [vmem:[%s5 + $0x8] sm:$0xff]
        %v751 = vld [vmem:[%s5 + $0x10] sm:$0xff]
        %v752 = vld [vmem:[%s5 + $0x18] sm:$0xff]
        %v753 = vld [vmem:[%s6] sm:$0xff]
        %v754 = vld [vmem:[%s6 + $0x8] sm:$0xff]
        %v755 = vld [vmem:[%s6 + $0x10] sm:$0xff]
        %v756 = vld [vmem:[%s6 + $0x18] sm:$0xff]
        %758 = vset.pattern.permute.xlu0 0
        %759 = vperm.xlu0 %758, %v753
        %v760 = vpop.permute.xlu0 %759
        %763 = vset.pattern.permute.xlu0 0
        %764 = vperm.xlu0 %763, %v754
        %v765 = vpop.permute.xlu0 %764
        %768 = vset.pattern.permute.xlu0 0
        %769 = vperm.xlu0 %768, %v755
        %v770 = vpop.permute.xlu0 %769
        %773 = vset.pattern.permute.xlu0 0
        %774 = vperm.xlu0 %773, %v756
        %v775 = vpop.permute.xlu0 %774
        %v781 = vunpack.c.l.b16 %v749
        %v782 = vunpack.c.h.b16 %v749
        %v783 = vunpack.c.l.b16 %v750
        %v784 = vunpack.c.h.b16 %v750
        %v785 = vunpack.c.l.b16 %v751
        %v786 = vunpack.c.h.b16 %v751
        %v787 = vunpack.c.l.b16 %v752
        %v788 = vunpack.c.h.b16 %v752
        %v789 = vpack.c.b16 %v783, %v781
        %v790 = vpack.c.b16 %v784, %v782
        %v791 = vpack.c.b16 %v787, %v785
        %v792 = vpack.c.b16 %v788, %v786
        %vm795 = vcmask 195584
        %v797 = vsel %vm795, %v790, 0
        %v800 = vsel %vm795, %v792, 0
        %v803 = vsel %vm352, %v747, 0
        %v806 = vsel %vm352, %v748, 0
        %808 = vmatpush.bf16.msra.mxu0 %v743
        %809 = vmatpush.bf16.msra.mxu0 %v741
        %810 = vmatpush.bf16.msra.mxu0 %v739
        %811 = vmatpush.bf16.msra.mxu0 %v737
        %812 = vmatpush.bf16.msra.mxu0 %v735
        %813 = vmatpush.bf16.msra.mxu0 %v733
        %814 = vmatpush.bf16.msra.mxu0 %v731
        %815 = vmatpush.bf16.msra.mxu0 %v729
        %816 = vmatmul.bf16.gmra.mxu0 %v789
        %v817 = vpop.f32.mrf.mxu0
        %v818 = vadd.f32 %v760, %v817
        %v819 = vpop.f32.mrf.mxu0
        %v820 = vadd.f32 %v765, %v819
        %821 = vmatmul.bf16.gmra.mxu0 %v791
        %v822 = vpop.f32.mrf.mxu0
        %v823 = vadd.f32 %v770, %v822
        %v824 = vpop.f32.mrf.mxu0
        %v825 = vadd.f32 %v775, %v824
        %826 = vdwg.mxu0
        %827 = vmatpush.bf16.msra.mxu0 0
        %828 = vmatpush.bf16.msra.mxu0 0
        %829 = vmatpush.bf16.msra.mxu0 0
        %830 = vmatpush.bf16.msra.mxu0 0
        %831 = vmatpush.bf16.msra.mxu0 0
        %832 = vmatpush.bf16.msra.mxu0 0
        %833 = vmatpush.bf16.msra.mxu0 %v803
        %834 = vmatpush.bf16.msra.mxu0 %v745
        %835 = vmatmul.bf16.gmra.mxu0 %v797
        %v836 = vpop.f32.mrf.mxu0
        %v837 = vadd.f32 %v818, %v836
        %v838 = vpop.f32.mrf.mxu0
        %v839 = vadd.f32 %v820, %v838
        %840 = vmatmul.bf16.gmra.mxu0 %v800
        %v841 = vpop.f32.mrf.mxu0
        %v842 = vadd.f32 %v823, %v841
        %v843 = vpop.f32.mrf.mxu0
        %v844 = vadd.f32 %v825, %v843
        %845 = vdwg.mxu0
        %846 = vmatpush.bf16.msra.mxu0 %v744
        %847 = vmatpush.bf16.msra.mxu0 %v742
        %848 = vmatpush.bf16.msra.mxu0 %v740
        %849 = vmatpush.bf16.msra.mxu0 %v738
        %850 = vmatpush.bf16.msra.mxu0 %v736
        %851 = vmatpush.bf16.msra.mxu0 %v734
        %852 = vmatpush.bf16.msra.mxu0 %v732
        %853 = vmatpush.bf16.msra.mxu0 %v730
        %854 = vmatmul.bf16.gmra.mxu0 %v789
        %v855 = vpop.f32.mrf.mxu0
        %v856 = vadd.f32 %v760, %v855
        %v857 = vpop.f32.mrf.mxu0
        %v858 = vadd.f32 %v765, %v857
        %859 = vmatmul.bf16.gmra.mxu0 %v791
        %v860 = vpop.f32.mrf.mxu0
        %v861 = vadd.f32 %v770, %v860
        %v862 = vpop.f32.mrf.mxu0
        %v863 = vadd.f32 %v775, %v862
        %864 = vdwg.mxu0
        %865 = vmatpush.bf16.msra.mxu0 0
        %866 = vmatpush.bf16.msra.mxu0 0
        %867 = vmatpush.bf16.msra.mxu0 0
        %868 = vmatpush.bf16.msra.mxu0 0
        %869 = vmatpush.bf16.msra.mxu0 0
        %870 = vmatpush.bf16.msra.mxu0 0
        %871 = vmatpush.bf16.msra.mxu0 %v806
        %872 = vmatpush.bf16.msra.mxu0 %v746
        %873 = vmatmul.bf16.gmra.mxu0 %v797
        %v874 = vpop.f32.mrf.mxu0
        %v875 = vadd.f32 %v856, %v874
        %v876 = vpop.f32.mrf.mxu0
        %v877 = vadd.f32 %v858, %v876
        %878 = vmatmul.bf16.gmra.mxu0 %v800
        %v879 = vpop.f32.mrf.mxu0
        %v880 = vadd.f32 %v861, %v879
        %v881 = vpop.f32.mrf.mxu0
        %v882 = vadd.f32 %v863, %v881
        %883 = vdwg.mxu0
        %v884 = vmax.f32 %v837, 0.0
        %v885 = vmax.f32 %v875, 0.0
        %v886 = vmax.f32 %v839, 0.0
        %v887 = vmax.f32 %v877, 0.0
        %v888 = vmax.f32 %v842, 0.0
        %v889 = vmax.f32 %v880, 0.0
        %v890 = vmax.f32 %v844, 0.0
        %v891 = vmax.f32 %v882, 0.0
        %892 = vst [vmem:[%s305] sm:$0xff] %v395
        %893 = vst [vmem:[%s305 + $0x8] sm:$0xff] %v396
        %894 = vst [vmem:[%s305 + $0x10] sm:$0xff] %v884
        %895 = vst [vmem:[%s305 + $0x18] sm:$0xff] %v885
        %896 = vst [vmem:[%s305 + $0x20] sm:$0xff] %v886
        %897 = vst [vmem:[%s305 + $0x28] sm:$0xff] %v887
        %898 = vst [vmem:[%s305 + $0x30] sm:$0xff] %v888
        %899 = vst [vmem:[%s305 + $0x38] sm:$0xff] %v889
        %900 = vst [vmem:[%s305 + $0x40] sm:$0xff] %v890
        %901 = vst [vmem:[%s305 + $0x48] sm:$0xff] %v891
        %s902 = sand.u32 %s183, 1
        %s903 = scalar_lea.sflag [#allocation4], %s902
        %s904 = sand.u32 %s183, 1
        %s905 = smul.addr %s904, 80
        %s906 = scalar_lea.vmem [#allocation7], %s905
        // Predicated region
        $region57: #{tpu_custom_call.1} parent=47 // pred_check
          %p907 = pneg %p193
        $region58: #{tpu_custom_call.1} parent=47 // pred_check_branch
          %909 = sbr.rel (%p907) target = $region60
        $region59: #{tpu_custom_call.1} parent=47 // pred_region
          %911 = vsyncadd %s903, 0
          %s912 = smul.addr %s23, 10
          %s913 = smul.addr %s912, 8
          %s914 = scalar_lea.hbm %s7, %s913
          %s915 = sshll.u32 %s906, 4
          %s916 = int_to_ptr.vmem [resolvable:$true] %s915
          %s917 = sshll.u32 %s914, 4
          %s918 = int_to_ptr.hbm [resolvable:$true] %s917
          %923 = dma.vmem_to_hbm [thread:$0]  %s916, 1280, %s918, %s903, 256, 256, 16
        $region60: #{tpu_custom_call.1} parent=47 // pred_fallthru
          _
      $region48: #{tpu_custom_call.1} parent=5 // pred_fallthru
        _
      %p924 = scmp.le.s32.totalorder 2, %s18
      // Predicated region
      $region61: #{tpu_custom_call.1} parent=5 // pred_check
        %p925 = pneg %p924
      $region62: #{tpu_custom_call.1} parent=5 // pred_check_branch
        %927 = sbr.rel (%p925) target = $region64
      $region63: #{tpu_custom_call.1} parent=5 // pred_region
        %s928 = ssub.s32 %s18, 2
        // Predicated region
        $region65: #{tpu_custom_call.1} parent=63 // pred_check
          %p929 = pneg %p199
        $region66: #{tpu_custom_call.1} parent=63 // pred_check_branch
          %931 = sbr.rel (%p929) target = $region68
        $region67: #{tpu_custom_call.1} parent=63 // pred_region
          %s932 = sand.u32 %s184, 1
          %s933 = scalar_lea.sflag [#allocation4], %s932
          %s934 = sand.u32 %s184, 1
          %s935 = smul.addr %s934, 80
          %s936 = scalar_lea.vmem [#allocation7], %s935
          %938 = dma.done %s933, 1280
        $region68: #{tpu_custom_call.1} parent=63 // pred_fallthru
          _
      $region64: #{tpu_custom_call.1} parent=5 // pred_fallthru
        _
    $region6: #{tpu_custom_call.1} parent=1 // loop_footer
      %s22 = sadd.s32 1, %s18
    $region7: #{tpu_custom_call.1} parent=1 // loop_footer_branch
      %17 = sbr.rel target = $region3
    $region8: #{tpu_custom_call.1} parent=1 // loop_exit
      _
    %939 = vsyncpa [#allocation3], 1
    %s940 = scalar_lea.sflag [#allocation3], 1
    %941 = vsyncpa %s940, 1
    %942 = vsyncpa [#allocation6], 1
    %943 = vsyncpa [#allocation4], 1
    %s944 = scalar_lea.sflag [#allocation4], 1
    %945 = vsyncpa %s944, 1

</llo_original>
